<compile_context>
chip_gen: v5e
topology: v5e:2x2
jax: 0.10.0
libtpu: 0.0.40
codegen_flags: <defaults>
</compile_context>

<pallas_src>
import math
from functools import partial

import numpy as np
import jax
import jax.numpy as jnp
from jax.experimental import pallas as pl
from jax.experimental.pallas import tpu as pltpu


def _round_up(x: int, m: int) -> int:
    return ((x + m - 1) // m) * m


# ----------------------------------------------------------------------------
# Host-side "module init" (mirrors NormalizedBasis.__init__, done in numpy under
# the moral equivalent of torch.no_grad(); results are constants).
# ----------------------------------------------------------------------------

def _bessel_np(x, weights, r_max):
    x = x[:, None]
    return (2.0 / r_max) * np.sin(weights[None, :] * x / r_max) / x


def make_normalized_basis_params(r_max, r_min=0.0, num_basis=8, n=4000,
                                 norm_basis_mean_shift=True):
    assert r_min >= 0.0 and r_max > r_min
    # BesselBasis default init: weights[b] = (b+1) * pi  (harmonic multiples).
    weights = np.linspace(1.0, float(num_basis), num_basis) * math.pi
    rs = np.linspace(r_min, r_max, n + 1)[1:]
    bs = _bessel_np(rs, weights, r_max)                     # [n, num_basis]
    if norm_basis_mean_shift:
        mean = bs.mean(axis=0)
        std = bs.std(axis=0, ddof=1)                        # torch.std_mean (unbiased)
    else:
        std = np.sqrt(np.mean(bs ** 2)) * np.ones((num_basis,))
        mean = np.zeros((num_basis,))
    inv_std = 1.0 / std

    params = dict(
        num_basis=int(num_basis),
        theta_coef=float(math.pi / r_max),                              # theta = x * pi/r_max
        scale=tuple(float(v) for v in (2.0 / r_max) * inv_std),         # per-basis
        offset=tuple(float(v) for v in mean * inv_std),                 # per-basis
    )
    ref_bufs = dict(weights=weights.astype(np.float32),
                    mean=mean.astype(np.float32),
                    inv_std=inv_std.astype(np.float32),
                    r_max=float(r_max))
    return params, ref_bufs


# ----------------------------------------------------------------------------
# Kernel: out[b, r, l] = sin((b+1)*theta) * (1/x) * scale[b] - offset[b]
#   x block: (TR, 128) packed edges; output block: (num_basis, TR, 128).
# ----------------------------------------------------------------------------

def _norm_basis_kernel(x_ref, o_ref, *, theta_coef, scale, offset):
    num_basis = len(scale)
    x = x_ref[...]                                   # (TR, 128) f32, fully packed vregs

    # Reciprocal on the EUP (approx) + one Newton refinement: per-edge cost, reused
    # across all basis rows; keeps the 1e-5-level accuracy of the reference.
    inv_x = pl.reciprocal(x, approx=True)
    inv_x = inv_x * (2.0 - x * inv_x)

    theta = x * theta_coef
    s1 = jnp.sin(theta)                              # only sin/cos evaluation in the kernel
    c1 = jnp.cos(theta)

    o_ref[0] = ((s1 * inv_x) * scale[0] - offset[0]).astype(o_ref.dtype)
    s, c = s1, c1
    for b in range(1, num_basis):
        # sin((b+1)t) = sin(bt)cos(t) + cos(bt)sin(t); cos likewise.  6 VALU ops/row.
        s, c = s * c1 + c * s1, c * c1 - s * s1
        o_ref[b] = ((s * inv_x) * scale[b] - offset[b]).astype(o_ref.dtype)


def _choose_block_rows(R: int, target_rows: int) -> int:
    if R <= 8:
        return R                                     # full (tiny) extent, single step
    # Big tiles, but keep >= ~4 grid steps for large problems (v7x has 2 TensorCores);
    # never drop below 64 rows (8192 edges) just to create extra steps.
    cap = max(64, _round_up(-(-R // 4), 8))
    tr = min(target_rows, cap, _round_up(R, 8))
    return max(8, (tr // 8) * 8)


def normalized_basis_forward(x, params, *, block_rows=256, out_dtype=jnp.float32):
    """x: [N] edge distances (> 0).

    Returns the lane-dense slab [num_basis, N_pad] with N_pad = round_up(N, 128);
    columns >= N are padding (edge index on lanes — feed directly into a downstream
    contraction over num_basis).  Use `as_module_output` for the PyTorch [N, num_basis]
    layout.  Pass N already padded to a multiple of 128 to skip the host-side pad.
    out_dtype=jnp.bfloat16 halves HBM write traffic if the consumer tolerates it
    (stores stay dense in this layout for any num_basis).
    """
    N = x.shape[0]
    nb = params["num_basis"]
    n_pad = _round_up(N, 128)

    xr = x.astype(jnp.float32)
    if n_pad != N:
        # Safe non-zero pad value so 1/x never produces inf in valid-looking lanes.
        xr = jnp.pad(xr, (0, n_pad - N), constant_values=1.0)
    R = n_pad // 128
    xr = xr.reshape(R, 128)                          # free row-major reshape

    tr = _choose_block_rows(R, block_rows)
    grid = -(-R // tr)                               # boundary block handled by Pallas

    kernel = partial(_norm_basis_kernel,
                     theta_coef=params["theta_coef"],
                     scale=params["scale"],
                     offset=params["offset"])

    out3 = pl.pallas_call(
        kernel,
        out_shape=jax.ShapeDtypeStruct((nb, R, 128), out_dtype),
        grid_spec=pltpu.PrefetchScalarGridSpec(
            num_scalar_prefetch=0,
            grid=(grid,),
            in_specs=[pl.BlockSpec((tr, 128), lambda i: (i, 0))],
            out_specs=pl.BlockSpec((nb, tr, 128), lambda i: (0, i, 0)),
        ),
        compiler_params=pltpu.CompilerParams(
            dimension_semantics=("parallel",),       # shards steps across v7x TensorCores
        ),
    )(xr)

    return out3.reshape(nb, n_pad)                   # free reshape (collapse last 2 dims)


def as_module_output(slab, n_edges):
    """Off-hot-path convenience: recover the PyTorch module layout [N, num_basis]."""
    return slab[:, :n_edges].T


# ----------------------------------------------------------------------------
# Demo / correctness check
# ----------------------------------------------------------------------------

if __name__ == "__main__":
    r_max = 4.0
    num_basis = 8
    params, ref_bufs = make_normalized_basis_params(
        r_max=r_max, r_min=0.0, num_basis=num_basis, n=4000, norm_basis_mean_shift=True)

    def reference(x):
        w = jnp.asarray(ref_bufs["weights"])         # [num_basis]
        mean = jnp.asarray(ref_bufs["mean"])
        inv_std = jnp.asarray(ref_bufs["inv_std"])
        xb = x[:, None]
        bess = (2.0 / r_max) * jnp.sin(w * xb / r_max) / xb
        return (bess - mean) * inv_std               # [N, num_basis]

    # Two small cases: (a) N not a multiple of 128 (host pad path, grid=1),
    # (b) N multiple of 128 with a small block so grid>1 and a ragged last block.
    cases = ((200, 256), (2816, 8))
    for N, brows in cases:
        kx = jax.random.fold_in(jax.random.PRNGKey(0), N)
        x = jax.random.uniform(kx, (N,), dtype=jnp.float32, minval=0.5, maxval=r_max)

        slab = normalized_basis_forward(x, params, block_rows=brows)
        slab = jax.block_until_ready(slab)

        got = as_module_output(slab, N)              # [N, num_basis] (check only)
        ref = reference(x)
        assert got.shape == (N, num_basis)
        assert jnp.allclose(got, ref, atol=5e-5, rtol=5e-5), (
            f"mismatch N={N}: max abs err {float(jnp.max(jnp.abs(got - ref)))}")

    print("KERNEL_OK")
</pallas_src>

<mosaic_0001>
module attributes {stable_mosaic.version = 11 : i64} {
  func.func @_norm_basis_kernel(%arg0: i32, %arg1: memref<2x128xf32, #tpu.memory_space<vmem>>, %arg2: memref<8x2x128xf32, #tpu.memory_space<vmem>>) attributes {dimension_semantics = [#tpu.dimension_semantics<parallel>], iteration_bounds = array<i64: 1>, scalar_prefetch = 0 : i64, scratch_operands = 0 : i64, tpu.core_type = #tpu.core_type<tc>, window_params = [{transform_indices = @transform_0, window_bounds = array<i64: 2, 128>}, {transform_indices = @transform_1, window_bounds = array<i64: 8, 2, 128>}]} {
    %c0 = arith.constant 0 : index
    %c0_0 = arith.constant 0 : index
    %0 = vector.load %arg1[%c0, %c0_0] : memref<2x128xf32, #tpu.memory_space<vmem>>, vector<2x128xf32>
    %1 = tpu.reciprocal %0 {approx = true} : vector<2x128xf32> -> vector<2x128xf32>
    %2 = arith.mulf %0, %1 : vector<2x128xf32>
    %cst = arith.constant 2.000000e+00 : f32
    %3 = vector.broadcast %cst : f32 to vector<2x128xf32>
    %4 = arith.subf %3, %2 : vector<2x128xf32>
    %5 = arith.mulf %1, %4 : vector<2x128xf32>
    %cst_1 = arith.constant 0.785398185 : f32
    %6 = vector.broadcast %cst_1 : f32 to vector<2x128xf32>
    %7 = arith.mulf %0, %6 : vector<2x128xf32>
    %8 = math.sin %7 : vector<2x128xf32>
    %9 = math.cos %7 : vector<2x128xf32>
    %10 = arith.mulf %8, %5 : vector<2x128xf32>
    %cst_2 = arith.constant 3.94887519 : f32
    %11 = vector.broadcast %cst_2 : f32 to vector<2x128xf32>
    %12 = arith.mulf %10, %11 : vector<2x128xf32>
    %cst_3 = arith.constant 1.82787943 : f32
    %13 = vector.broadcast %cst_3 : f32 to vector<2x128xf32>
    %14 = arith.subf %12, %13 : vector<2x128xf32>
    %c0_4 = arith.constant 0 : index
    %c0_5 = arith.constant 0 : index
    %c0_6 = arith.constant 0 : index
    %15 = vector.load %arg2[%c0_4, %c0_5, %c0_6] : memref<8x2x128xf32, #tpu.memory_space<vmem>>, vector<1x2x128xf32>
    %16 = vector.shape_cast %15 : vector<1x2x128xf32> to vector<2x128xf32>
    %17 = vector.shape_cast %14 : vector<2x128xf32> to vector<1x2x128xf32>
    tpu.vector_store %arg2[%c0_4, %c0_5, %c0_6], %17 {strides = array<i32>} : memref<8x2x128xf32, #tpu.memory_space<vmem>>, vector<1x2x128xf32>,
    %18 = arith.mulf %8, %9 : vector<2x128xf32>
    %19 = arith.mulf %9, %8 : vector<2x128xf32>
    %20 = arith.addf %18, %19 : vector<2x128xf32>
    %21 = arith.mulf %9, %9 : vector<2x128xf32>
    %22 = arith.mulf %8, %8 : vector<2x128xf32>
    %23 = arith.subf %21, %22 : vector<2x128xf32>
    %24 = arith.mulf %20, %5 : vector<2x128xf32>
    %cst_7 = arith.constant 1.47406864 : f32
    %25 = vector.broadcast %cst_7 : f32 to vector<2x128xf32>
    %26 = arith.mulf %24, %25 : vector<2x128xf32>
    %cst_8 = arith.constant 0.522323787 : f32
    %27 = vector.broadcast %cst_8 : f32 to vector<2x128xf32>
    %28 = arith.subf %26, %27 : vector<2x128xf32>
    %c1 = arith.constant 1 : index
    %c0_9 = arith.constant 0 : index
    %c0_10 = arith.constant 0 : index
    %29 = vector.load %arg2[%c1, %c0_9, %c0_10] : memref<8x2x128xf32, #tpu.memory_space<vmem>>, vector<1x2x128xf32>
    %30 = vector.shape_cast %29 : vector<1x2x128xf32> to vector<2x128xf32>
    %31 = vector.shape_cast %28 : vector<2x128xf32> to vector<1x2x128xf32>
    tpu.vector_store %arg2[%c1, %c0_9, %c0_10], %31 {strides = array<i32>} : memref<8x2x128xf32, #tpu.memory_space<vmem>>, vector<1x2x128xf32>,
    %32 = arith.mulf %20, %9 : vector<2x128xf32>
    %33 = arith.mulf %23, %8 : vector<2x128xf32>
    %34 = arith.addf %32, %33 : vector<2x128xf32>
    %35 = arith.mulf %23, %9 : vector<2x128xf32>
    %36 = arith.mulf %20, %8 : vector<2x128xf32>
    %37 = arith.subf %35, %36 : vector<2x128xf32>
    %38 = arith.mulf %34, %5 : vector<2x128xf32>
    %cst_11 = arith.constant 1.17963707 : f32
    %39 = vector.broadcast %cst_11 : f32 to vector<2x128xf32>
    %40 = arith.mulf %38, %39 : vector<2x128xf32>
    %cst_12 = arith.constant 0.493555337 : f32
    %41 = vector.broadcast %cst_12 : f32 to vector<2x128xf32>
    %42 = arith.subf %40, %41 : vector<2x128xf32>
    %c2 = arith.constant 2 : index
    %c0_13 = arith.constant 0 : index
    %c0_14 = arith.constant 0 : index
    %43 = vector.load %arg2[%c2, %c0_13, %c0_14] : memref<8x2x128xf32, #tpu.memory_space<vmem>>, vector<1x2x128xf32>
    %44 = vector.shape_cast %43 : vector<1x2x128xf32> to vector<2x128xf32>
    %45 = vector.shape_cast %42 : vector<2x128xf32> to vector<1x2x128xf32>
    tpu.vector_store %arg2[%c2, %c0_13, %c0_14], %45 {strides = array<i32>} : memref<8x2x128xf32, #tpu.memory_space<vmem>>, vector<1x2x128xf32>,
    %46 = arith.mulf %34, %9 : vector<2x128xf32>
    %47 = arith.mulf %37, %8 : vector<2x128xf32>
    %48 = arith.addf %46, %47 : vector<2x128xf32>
    %49 = arith.mulf %37, %9 : vector<2x128xf32>
    %50 = arith.mulf %34, %8 : vector<2x128xf32>
    %51 = arith.subf %49, %50 : vector<2x128xf32>
    %52 = arith.mulf %48, %5 : vector<2x128xf32>
    %cst_15 = arith.constant 0.970045089 : f32
    %53 = vector.broadcast %cst_15 : f32 to vector<2x128xf32>
    %54 = arith.mulf %52, %53 : vector<2x128xf32>
    %cst_16 = arith.constant 3.614850e-01 : f32
    %55 = vector.broadcast %cst_16 : f32 to vector<2x128xf32>
    %56 = arith.subf %54, %55 : vector<2x128xf32>
    %c3 = arith.constant 3 : index
    %c0_17 = arith.constant 0 : index
    %c0_18 = arith.constant 0 : index
    %57 = vector.load %arg2[%c3, %c0_17, %c0_18] : memref<8x2x128xf32, #tpu.memory_space<vmem>>, vector<1x2x128xf32>
    %58 = vector.shape_cast %57 : vector<1x2x128xf32> to vector<2x128xf32>
    %59 = vector.shape_cast %56 : vector<2x128xf32> to vector<1x2x128xf32>
    tpu.vector_store %arg2[%c3, %c0_17, %c0_18], %59 {strides = array<i32>} : memref<8x2x128xf32, #tpu.memory_space<vmem>>, vector<1x2x128xf32>,
    %60 = arith.mulf %48, %9 : vector<2x128xf32>
    %61 = arith.mulf %51, %8 : vector<2x128xf32>
    %62 = arith.addf %60, %61 : vector<2x128xf32>
    %63 = arith.mulf %51, %9 : vector<2x128xf32>
    %64 = arith.mulf %48, %8 : vector<2x128xf32>
    %65 = arith.subf %63, %64 : vector<2x128xf32>
    %66 = arith.mulf %62, %5 : vector<2x128xf32>
    %cst_19 = arith.constant 0.862940907 : f32
    %67 = vector.broadcast %cst_19 : f32 to vector<2x128xf32>
    %68 = arith.mulf %66, %67 : vector<2x128xf32>
    %cst_20 = arith.constant 0.352080166 : f32
    %69 = vector.broadcast %cst_20 : f32 to vector<2x128xf32>
    %70 = arith.subf %68, %69 : vector<2x128xf32>
    %c4 = arith.constant 4 : index
    %c0_21 = arith.constant 0 : index
    %c0_22 = arith.constant 0 : index
    %71 = vector.load %arg2[%c4, %c0_21, %c0_22] : memref<8x2x128xf32, #tpu.memory_space<vmem>>, vector<1x2x128xf32>
    %72 = vector.shape_cast %71 : vector<1x2x128xf32> to vector<2x128xf32>
    %73 = vector.shape_cast %70 : vector<2x128xf32> to vector<1x2x128xf32>
    tpu.vector_store %arg2[%c4, %c0_21, %c0_22], %73 {strides = array<i32>} : memref<8x2x128xf32, #tpu.memory_space<vmem>>, vector<1x2x128xf32>,
    %74 = arith.mulf %62, %9 : vector<2x128xf32>
    %75 = arith.mulf %65, %8 : vector<2x128xf32>
    %76 = arith.addf %74, %75 : vector<2x128xf32>
    %77 = arith.mulf %65, %9 : vector<2x128xf32>
    %78 = arith.mulf %62, %8 : vector<2x128xf32>
    %79 = arith.subf %77, %78 : vector<2x128xf32>
    %80 = arith.mulf %76, %5 : vector<2x128xf32>
    %cst_23 = arith.constant 0.773035109 : f32
    %81 = vector.broadcast %cst_23 : f32 to vector<2x128xf32>
    %82 = arith.mulf %80, %81 : vector<2x128xf32>
    %cst_24 = arith.constant 0.292918056 : f32
    %83 = vector.broadcast %cst_24 : f32 to vector<2x128xf32>
    %84 = arith.subf %82, %83 : vector<2x128xf32>
    %c5 = arith.constant 5 : index
    %c0_25 = arith.constant 0 : index
    %c0_26 = arith.constant 0 : index
    %85 = vector.load %arg2[%c5, %c0_25, %c0_26] : memref<8x2x128xf32, #tpu.memory_space<vmem>>, vector<1x2x128xf32>
    %86 = vector.shape_cast %85 : vector<1x2x128xf32> to vector<2x128xf32>
    %87 = vector.shape_cast %84 : vector<2x128xf32> to vector<1x2x128xf32>
    tpu.vector_store %arg2[%c5, %c0_25, %c0_26], %87 {strides = array<i32>} : memref<8x2x128xf32, #tpu.memory_space<vmem>>, vector<1x2x128xf32>,
    %88 = arith.mulf %76, %9 : vector<2x128xf32>
    %89 = arith.mulf %79, %8 : vector<2x128xf32>
    %90 = arith.addf %88, %89 : vector<2x128xf32>
    %91 = arith.mulf %79, %9 : vector<2x128xf32>
    %92 = arith.mulf %76, %8 : vector<2x128xf32>
    %93 = arith.subf %91, %92 : vector<2x128xf32>
    %94 = arith.mulf %90, %5 : vector<2x128xf32>
    %cst_27 = arith.constant 0.713959455 : f32
    %95 = vector.broadcast %cst_27 : f32 to vector<2x128xf32>
    %96 = arith.mulf %94, %95 : vector<2x128xf32>
    %cst_28 = arith.constant 0.287964195 : f32
    %97 = vector.broadcast %cst_28 : f32 to vector<2x128xf32>
    %98 = arith.subf %96, %97 : vector<2x128xf32>
    %c6 = arith.constant 6 : index
    %c0_29 = arith.constant 0 : index
    %c0_30 = arith.constant 0 : index
    %99 = vector.load %arg2[%c6, %c0_29, %c0_30] : memref<8x2x128xf32, #tpu.memory_space<vmem>>, vector<1x2x128xf32>
    %100 = vector.shape_cast %99 : vector<1x2x128xf32> to vector<2x128xf32>
    %101 = vector.shape_cast %98 : vector<2x128xf32> to vector<1x2x128xf32>
    tpu.vector_store %arg2[%c6, %c0_29, %c0_30], %101 {strides = array<i32>} : memref<8x2x128xf32, #tpu.memory_space<vmem>>, vector<1x2x128xf32>,
    %102 = arith.mulf %90, %9 : vector<2x128xf32>
    %103 = arith.mulf %93, %8 : vector<2x128xf32>
    %104 = arith.addf %102, %103 : vector<2x128xf32>
    %105 = arith.mulf %104, %5 : vector<2x128xf32>
    %cst_31 = arith.constant 0.661412358 : f32
    %106 = vector.broadcast %cst_31 : f32 to vector<2x128xf32>
    %107 = arith.mulf %105, %106 : vector<2x128xf32>
    %cst_32 = arith.constant 0.252657831 : f32
    %108 = vector.broadcast %cst_32 : f32 to vector<2x128xf32>
    %109 = arith.subf %107, %108 : vector<2x128xf32>
    %c7 = arith.constant 7 : index
    %c0_33 = arith.constant 0 : index
    %c0_34 = arith.constant 0 : index
    %110 = vector.load %arg2[%c7, %c0_33, %c0_34] : memref<8x2x128xf32, #tpu.memory_space<vmem>>, vector<1x2x128xf32>
    %111 = vector.shape_cast %110 : vector<1x2x128xf32> to vector<2x128xf32>
    %112 = vector.shape_cast %109 : vector<2x128xf32> to vector<1x2x128xf32>
    tpu.vector_store %arg2[%c7, %c0_33, %c0_34], %112 {strides = array<i32>} : memref<8x2x128xf32, #tpu.memory_space<vmem>>, vector<1x2x128xf32>,
    return
  }
  func.func @transform_0(%arg0: i32) -> (i32, i32) {
    %c0_i32 = arith.constant 0 : i32
    %c0_i32_0 = arith.constant 0 : i32
    return %arg0, %c0_i32 : i32, i32
  }
  func.func @transform_1(%arg0: i32) -> (i32, i32, i32) {
    %c0_i32 = arith.constant 0 : i32
    %c0_i32_0 = arith.constant 0 : i32
    %c0_i32_1 = arith.constant 0 : i32
    return %c0_i32, %arg0, %c0_i32_0 : i32, i32, i32
  }
}

</mosaic_0001>

<llo_original>
// kernel: tpu_custom_call.1
$region0: #{tpu_custom_call.1}
  #allocation0 [shape = 'u32[]', space=smem, size = 0x4, offset = 0x4, fixed_abs, tag = 'smem constant byte address 0x4 - core index']
  #allocation1 [shape = 'u32[72,128]{1,0:T(1,128)}', space=vmem, size = 0x9000, scoped, tag = 'internal scratch']
  %s0 = inlined_call_operand.hbm [shape: f32[2,128], index: 0, kind: input, shape index: {}]
  %s1 = inlined_call_operand.hbm [shape: f32[8,2,128], index: 1, kind: output, shape index: {}]
  %s2 = sld [smem:[#allocation0]]
  $region18: #{tpu_custom_call.1} parent=0
    _
  %s4 = ssub.s32 1, %s2
  %s5 = scalar_select 0, %s4, %s2
  $region1: #{tpu_custom_call.1} parent=0
    #allocation2 [shape = 'u8[1024]{0}', space=vmem, size = 0x400, scoped, tag = 'input window, operand 0, single buffered']
    #allocation3 [shape = 's32[1]{0}', space=sflag, size = 0x4, scoped, tag = 'scoped memory for tpu_custom_call.1']
    #allocation4 [shape = 's32[1]{0}', space=sflag, size = 0x4, scoped, tag = 'scoped memory for tpu_custom_call.1']
    #allocation5 [shape = 'u8[8192]{0}', space=vmem, size = 0x2000, scoped, tag = 'output window, operand 0, single buffered']
    %6 = vsyncpa [#allocation3], 0
    %7 = vsyncpa [#allocation4], 0
    // Predicated region
    $region2: #{tpu_custom_call.1} parent=1 // pred_check
      _
    $region3: #{tpu_custom_call.1} parent=1 // pred_check_branch
      %9 = sbr.rel (0) target = $region5
    $region4: #{tpu_custom_call.1} parent=1 // pred_region
      %11 = vsyncadd [#allocation3], 0
      %s13 = sshll.u32 %s0, 4
      %s14 = int_to_ptr.hbm [resolvable:$true] %s13
      %s15 = sshll.u32 [#allocation2], 4
      %s16 = int_to_ptr.vmem [resolvable:$true] %s15
      %18 = dma.hbm_to_vmem [thread:$0]  %s14, 32, %s16, [#allocation3]
    $region5: #{tpu_custom_call.1} parent=1 // pred_fallthru
      _
    // Predicated region
    $region6: #{tpu_custom_call.1} parent=1 // pred_check
      _
    $region7: #{tpu_custom_call.1} parent=1 // pred_check_branch
      %20 = sbr.rel (0) target = $region9
    $region8: #{tpu_custom_call.1} parent=1 // pred_region
      %22 = dma.done [#allocation3], 32
    $region9: #{tpu_custom_call.1} parent=1 // pred_fallthru
      _
    %v23 = vld [vmem:[#allocation2] sm:$0x3]
    %v24 = vrcp.pop %v23
    %v25 = vmul.f32 %v23, %v24
    %v26 = vsub.f32 2.0, %v25
    %v27 = vmul.f32 %v24, %v26
    %v28 = vmul.f32 %v23, 0.7853982
    %v29 = vand.u32 2147483647, %v28
    %vm30 = vcmp.le.f32.partialorder %v29, 0.7853982
    %vm31 = vcmp.lt.s32.totalorder %v28, 0
    %v32 = vand.u32 %v28, 2139095040
    %v33 = vshrl.u32 %v32, 23
    %v34 = vsub.s32 %v33, 127
    %v35 = vand.u32 2147483647, %v28
    %v36 = vand.u32 %v35, 8388607
    %v37 = vor.u32 %v36, 8388608
    %v38 = vsub.s32 0, %v37
    %v39 = vadd.s32 %v34, 1
    %vm40 = vcmp.gt.s32.totalorder %v39, 0
    %v41 = vsel %vm40, %v39, 0
    %v42 = vshrl.u32 %v41, 5
    %v43 = vand.u32 %v41, 31
    %v44 = vsub.s32 32, %v43
    %v45 = vshrl.u32 683565275, %v44
    %v46 = vshll.u32 683565275, %v43
    %v47 = vshrl.u32 2475754826, %v44
    %v48 = vor.u32 %v46, %v47
    %v49 = vshll.u32 2475754826, %v43
    %v50 = vshrl.u32 2131351028, %v44
    %v51 = vor.u32 %v49, %v50
    %v52 = vshll.u32 2131351028, %v43
    %v53 = vshrl.u32 2102212464, %v44
    %v54 = vor.u32 %v52, %v53
    %v55 = vshll.u32 2102212464, %v43
    %v56 = vshrl.u32 920167782, %v44
    %v57 = vor.u32 %v55, %v56
    %v58 = vshll.u32 920167782, %v43
    %v59 = vshrl.u32 1326507024, %v44
    %v60 = vor.u32 %v58, %v59
    %vm61 = vcmp.lt.s32.totalorder %v42, 1
    %vm62 = vcmp.lt.s32.totalorder %v42, 2
    %vm63 = vcmp.lt.s32.totalorder %v42, 3
    %vm64 = vcmp.lt.s32.totalorder %v42, 4
    %v65 = vsel %vm61, %v45, %v48
    %v66 = vsel %vm64, %v54, 2102212464
    %v67 = vsel %vm63, %v51, %v66
    %v68 = vsel %vm62, %v65, %v67
    %v69 = vsel %vm61, %v48, %v51
    %v70 = vsel %vm64, %v57, 920167782
    %v71 = vsel %vm63, %v54, %v70
    %v72 = vsel %vm62, %v69, %v71
    %v73 = vsel %vm61, %v51, %v54
    %v74 = vsel %vm64, %v60, 1326507024
    %v75 = vsel %vm63, %v57, %v74
    %v76 = vsel %vm62, %v73, %v75
    %v77 = vshll.u32 %v37, 8
    %v78 = vand.u32 %v77, 65535
    %v79 = vshrl.u32 %v77, 16
    %v80 = vand.u32 %v76, 65535
    %v81 = vshrl.u32 %v76, 16
    %v82 = vmul.u32 %v78, %v80
    %v83 = vmul.u32 %v78, %v81
    %v84 = vmul.u32 %v79, %v80
    %v85 = vmul.u32 %v79, %v81
    %v86 = vshll.u32 %v83, 16
    %v87 = vshrl.u32 %v83, 16
    %v88 = vshll.u32 %v84, 16
    %v89 = vshrl.u32 %v84, 16
    %vm90 = vc.u32 %v82, %v86
    %v91 = vsel %vm90, 1, 0
    %v92 = vadd.s32 %v82, %v86
    %v93 = vadd.s32 %v85, %v91
    %vm94 = vc.u32 %v92, %v88
    %v95 = vsel %vm94, 1, 0
    %v96 = vadd.s32 %v92, %v88
    %v97 = vadd.s32 %v93, %v95
    %v98 = vadd.s32 %v97, %v87
    %v99 = vadd.s32 %v98, %v89
    %v100 = vand.u32 %v77, 65535
    %v101 = vshrl.u32 %v77, 16
    %v102 = vand.u32 %v72, 65535
    %v103 = vshrl.u32 %v72, 16
    %v104 = vmul.u32 %v100, %v102
    %v105 = vmul.u32 %v100, %v103
    %v106 = vmul.u32 %v101, %v102
    %v107 = vmul.u32 %v101, %v103
    %v108 = vshll.u32 %v105, 16
    %v109 = vshrl.u32 %v105, 16
    %v110 = vshll.u32 %v106, 16
    %v111 = vshrl.u32 %v106, 16
    %vm112 = vc.u32 %v104, %v108
    %v113 = vsel %vm112, 1, 0
    %v114 = vadd.s32 %v104, %v108
    %v115 = vadd.s32 %v107, %v113
    %vm116 = vc.u32 %v114, %v110
    %v117 = vsel %vm116, 1, 0
    %v118 = vadd.s32 %v114, %v110
    %v119 = vadd.s32 %v115, %v117
    %v120 = vadd.s32 %v119, %v109
    %v121 = vadd.s32 %v120, %v111
    %v122 = vmul.u32 %v77, %v68
    %v123 = vadd.s32 %v99, %v118
    %vm124 = vc.u32 %v99, %v118
    %v125 = vadd.s32 %v121, 1
    %v126 = vsel %vm124, %v125, %v121
    %v127 = vadd.s32 %v122, %v126
    %v128 = vadd.s32 %v127, 536870912
    %v129 = vshrl.u32 %v128, 30
    %v130 = vshll.u32 %v129, 30
    %v131 = vsub.s32 %v127, %v130
    %vm132 = vcmp.lt.s32.totalorder %v131, 0
    %v133 = vsub.s32 0, %v131
    %v134 = vsel %vm132, %v133, %v131
    %v135 = vclz %v134
    %v136 = vsub.s32 %v135, 2
    %vm137 = vcmp.gt.s32.totalorder 0, %v136
    %v138 = vsel %vm137, 0, %v136
    %v139 = vsub.s32 32, %v138
    %v140 = vshll.u32 %v131, %v138
    %v141 = vshrl.u32 %v123, %v139
    %v142 = vor.u32 %v140, %v141
    %v143 = vsub.s32 4294967266, %v138
    %v144 = vadd.s32 %v143, 127
    %v145 = vshll.u32 %v144, 23
    %v146 = vor.u32 4788187, %v145
    %v147 = vand.u32 2147483647, %v146
    %v149 = vcvt.s32.f32 %v142
    %v150 = vmul.f32 %v149, %v147
    %v151 = vxor.u32 %v150, 2147483648
    %v152 = vsel %vm31, %v151, %v150
    %v153 = vsub.s32 4, %v129
    %v154 = vsel %vm31, %v153, %v129
    %v155 = vsel %vm30, %v28, %v152
    %v156 = vsel %vm30, 0, %v154
    %v157 = vmul.f32 %v155, %v155
    %v158 = vmul.f32 %v157, -0.001358992
    %v159 = vadd.f32 %v158, 0.041655596
    %v160 = vmul.f32 %v157, %v159
    %v161 = vadd.f32 %v160, -0.4999988
    %v162 = vmul.f32 %v157, %v161
    %v163 = vadd.f32 1.0, %v162
    %v164 = vmul.f32 %v155, %v155
    %v165 = vmul.f32 %v164, -0.00019511016
    %v166 = vadd.f32 %v165, 0.008332121
    %v167 = vmul.f32 %v164, %v166
    %v168 = vadd.f32 %v167, -0.16666654
    %v169 = vmul.f32 %v164, %v168
    %v170 = vadd.f32 %v169, 1.0
    %v171 = vmul.f32 %v170, %v155
    %vm172 = vweird.f32 %v28
    %v173 = vadd.s32 %v156, 3
    %v174 = vand.u32 %v173, 3
    %vm175 = vcmp.lt.s32.totalorder %v174, 2
    %vm176 = vcmp.eq.s32.totalorder %v174, 0
    %v177 = vxor.u32 %v171, 2147483648
    %v178 = vsel %vm176, %v163, %v177
    %vm179 = vcmp.eq.s32.totalorder %v174, 2
    %v180 = vxor.u32 %v163, 2147483648
    %v181 = vsel %vm179, %v180, %v171
    %v182 = vsel %vm175, %v178, %v181
    %v183 = vsel %vm172, nan, %v182
    %v184 = vand.u32 2147483647, %v28
    %vm185 = vcmp.le.f32.partialorder %v184, 0.7853982
    %vm186 = vcmp.lt.s32.totalorder %v28, 0
    %v187 = vand.u32 %v28, 2139095040
    %v188 = vshrl.u32 %v187, 23
    %v189 = vsub.s32 %v188, 127
    %v190 = vand.u32 2147483647, %v28
    %v191 = vand.u32 %v190, 8388607
    %v192 = vor.u32 %v191, 8388608
    %v193 = vsub.s32 0, %v192
    %v194 = vadd.s32 %v189, 1
    %vm195 = vcmp.gt.s32.totalorder %v194, 0
    %v196 = vsel %vm195, %v194, 0
    %v197 = vshrl.u32 %v196, 5
    %v198 = vand.u32 %v196, 31
    %v199 = vsub.s32 32, %v198
    %v200 = vshrl.u32 683565275, %v199
    %v201 = vshll.u32 683565275, %v198
    %v202 = vshrl.u32 2475754826, %v199
    %v203 = vor.u32 %v201, %v202
    %v204 = vshll.u32 2475754826, %v198
    %v205 = vshrl.u32 2131351028, %v199
    %v206 = vor.u32 %v204, %v205
    %v207 = vshll.u32 2131351028, %v198
    %v208 = vshrl.u32 2102212464, %v199
    %v209 = vor.u32 %v207, %v208
    %v210 = vshll.u32 2102212464, %v198
    %v211 = vshrl.u32 920167782, %v199
    %v212 = vor.u32 %v210, %v211
    %v213 = vshll.u32 920167782, %v198
    %v214 = vshrl.u32 1326507024, %v199
    %v215 = vor.u32 %v213, %v214
    %vm216 = vcmp.lt.s32.totalorder %v197, 1
    %vm217 = vcmp.lt.s32.totalorder %v197, 2
    %vm218 = vcmp.lt.s32.totalorder %v197, 3
    %vm219 = vcmp.lt.s32.totalorder %v197, 4
    %v220 = vsel %vm216, %v200, %v203
    %v221 = vsel %vm219, %v209, 2102212464
    %v222 = vsel %vm218, %v206, %v221
    %v223 = vsel %vm217, %v220, %v222
    %v224 = vsel %vm216, %v203, %v206
    %v225 = vsel %vm219, %v212, 920167782
    %v226 = vsel %vm218, %v209, %v225
    %v227 = vsel %vm217, %v224, %v226
    %v228 = vsel %vm216, %v206, %v209
    %v229 = vsel %vm219, %v215, 1326507024
    %v230 = vsel %vm218, %v212, %v229
    %v231 = vsel %vm217, %v228, %v230
    %v232 = vshll.u32 %v192, 8
    %v233 = vand.u32 %v232, 65535
    %v234 = vshrl.u32 %v232, 16
    %v235 = vand.u32 %v231, 65535
    %v236 = vshrl.u32 %v231, 16
    %v237 = vmul.u32 %v233, %v235
    %v238 = vmul.u32 %v233, %v236
    %v239 = vmul.u32 %v234, %v235
    %v240 = vmul.u32 %v234, %v236
    %v241 = vshll.u32 %v238, 16
    %v242 = vshrl.u32 %v238, 16
    %v243 = vshll.u32 %v239, 16
    %v244 = vshrl.u32 %v239, 16
    %vm245 = vc.u32 %v237, %v241
    %v246 = vsel %vm245, 1, 0
    %v247 = vadd.s32 %v237, %v241
    %v248 = vadd.s32 %v240, %v246
    %vm249 = vc.u32 %v247, %v243
    %v250 = vsel %vm249, 1, 0
    %v251 = vadd.s32 %v247, %v243
    %v252 = vadd.s32 %v248, %v250
    %v253 = vadd.s32 %v252, %v242
    %v254 = vadd.s32 %v253, %v244
    %v255 = vand.u32 %v232, 65535
    %v256 = vshrl.u32 %v232, 16
    %v257 = vand.u32 %v227, 65535
    %v258 = vshrl.u32 %v227, 16
    %v259 = vmul.u32 %v255, %v257
    %v260 = vmul.u32 %v255, %v258
    %v261 = vmul.u32 %v256, %v257
    %v262 = vmul.u32 %v256, %v258
    %v263 = vshll.u32 %v260, 16
    %v264 = vshrl.u32 %v260, 16
    %v265 = vshll.u32 %v261, 16
    %v266 = vshrl.u32 %v261, 16
    %vm267 = vc.u32 %v259, %v263
    %v268 = vsel %vm267, 1, 0
    %v269 = vadd.s32 %v259, %v263
    %v270 = vadd.s32 %v262, %v268
    %vm271 = vc.u32 %v269, %v265
    %v272 = vsel %vm271, 1, 0
    %v273 = vadd.s32 %v269, %v265
    %v274 = vadd.s32 %v270, %v272
    %v275 = vadd.s32 %v274, %v264
    %v276 = vadd.s32 %v275, %v266
    %v277 = vmul.u32 %v232, %v223
    %v278 = vadd.s32 %v254, %v273
    %vm279 = vc.u32 %v254, %v273
    %v280 = vadd.s32 %v276, 1
    %v281 = vsel %vm279, %v280, %v276
    %v282 = vadd.s32 %v277, %v281
    %v283 = vadd.s32 %v282, 536870912
    %v284 = vshrl.u32 %v283, 30
    %v285 = vshll.u32 %v284, 30
    %v286 = vsub.s32 %v282, %v285
    %vm287 = vcmp.lt.s32.totalorder %v286, 0
    %v288 = vsub.s32 0, %v286
    %v289 = vsel %vm287, %v288, %v286
    %v290 = vclz %v289
    %v291 = vsub.s32 %v290, 2
    %vm292 = vcmp.gt.s32.totalorder 0, %v291
    %v293 = vsel %vm292, 0, %v291
    %v294 = vsub.s32 32, %v293
    %v295 = vshll.u32 %v286, %v293
    %v296 = vshrl.u32 %v278, %v294
    %v297 = vor.u32 %v295, %v296
    %v298 = vsub.s32 4294967266, %v293
    %v299 = vadd.s32 %v298, 127
    %v300 = vshll.u32 %v299, 23
    %v301 = vor.u32 4788187, %v300
    %v302 = vand.u32 2147483647, %v301
    %v304 = vcvt.s32.f32 %v297
    %v305 = vmul.f32 %v304, %v302
    %v306 = vxor.u32 %v305, 2147483648
    %v307 = vsel %vm186, %v306, %v305
    %v308 = vsub.s32 4, %v284
    %v309 = vsel %vm186, %v308, %v284
    %v310 = vsel %vm185, %v28, %v307
    %v311 = vsel %vm185, 0, %v309
    %v312 = vmul.f32 %v310, %v310
    %v313 = vmul.f32 %v312, -0.001358992
    %v314 = vadd.f32 %v313, 0.041655596
    %v315 = vmul.f32 %v312, %v314
    %v316 = vadd.f32 %v315, -0.4999988
    %v317 = vmul.f32 %v312, %v316
    %v318 = vadd.f32 1.0, %v317
    %v319 = vmul.f32 %v310, %v310
    %v320 = vmul.f32 %v319, -0.00019511016
    %v321 = vadd.f32 %v320, 0.008332121
    %v322 = vmul.f32 %v319, %v321
    %v323 = vadd.f32 %v322, -0.16666654
    %v324 = vmul.f32 %v319, %v323
    %v325 = vadd.f32 %v324, 1.0
    %v326 = vmul.f32 %v325, %v310
    %vm327 = vweird.f32 %v28
    %v328 = vand.u32 %v311, 3
    %vm329 = vcmp.lt.s32.totalorder %v328, 2
    %vm330 = vcmp.eq.s32.totalorder %v328, 0
    %v331 = vxor.u32 %v326, 2147483648
    %v332 = vsel %vm330, %v318, %v331
    %vm333 = vcmp.eq.s32.totalorder %v328, 2
    %v334 = vxor.u32 %v318, 2147483648
    %v335 = vsel %vm333, %v334, %v326
    %v336 = vsel %vm329, %v332, %v335
    %v337 = vsel %vm327, nan, %v336
    %v338 = vmul.f32 %v183, %v27
    %v339 = vmul.f32 %v338, 3.9488752
    %v340 = vsub.f32 %v339, 1.8278794
    %341 = vst [vmem:[#allocation5] sm:$0x3] %v340
    %v342 = vmul.f32 %v183, %v337
    %v343 = vadd.f32 %v342, %v342
    %v344 = vmul.f32 %v337, %v337
    %v345 = vmul.f32 %v183, %v183
    %v346 = vsub.f32 %v344, %v345
    %v347 = vmul.f32 %v343, %v27
    %v348 = vmul.f32 %v347, 1.4740686
    %v349 = vsub.f32 %v348, 0.5223238
    %s350 = scalar_lea.vmem [#allocation5], 2
    %351 = vst [vmem:[%s350] sm:$0x3] %v349
    %v352 = vmul.f32 %v343, %v337
    %v353 = vmul.f32 %v346, %v183
    %v354 = vadd.f32 %v352, %v353
    %v355 = vmul.f32 %v346, %v337
    %v356 = vmul.f32 %v343, %v183
    %v357 = vsub.f32 %v355, %v356
    %v358 = vmul.f32 %v354, %v27
    %v359 = vmul.f32 %v358, 1.1796371
    %v360 = vsub.f32 %v359, 0.49355534
    %s361 = scalar_lea.vmem [#allocation5], 4
    %362 = vst [vmem:[%s361] sm:$0x3] %v360
    %v363 = vmul.f32 %v354, %v337
    %v364 = vmul.f32 %v357, %v183
    %v365 = vadd.f32 %v363, %v364
    %v366 = vmul.f32 %v357, %v337
    %v367 = vmul.f32 %v354, %v183
    %v368 = vsub.f32 %v366, %v367
    %v369 = vmul.f32 %v365, %v27
    %v370 = vmul.f32 %v369, 0.9700451
    %v371 = vsub.f32 %v370, 0.361485
    %s372 = scalar_lea.vmem [#allocation5], 6
    %373 = vst [vmem:[%s372] sm:$0x3] %v371
    %v374 = vmul.f32 %v365, %v337
    %v375 = vmul.f32 %v368, %v183
    %v376 = vadd.f32 %v374, %v375
    %v377 = vmul.f32 %v368, %v337
    %v378 = vmul.f32 %v365, %v183
    %v379 = vsub.f32 %v377, %v378
    %v380 = vmul.f32 %v376, %v27
    %v381 = vmul.f32 %v380, 0.8629409
    %v382 = vsub.f32 %v381, 0.35208017
    %s383 = scalar_lea.vmem [#allocation5], 8
    %384 = vst [vmem:[%s383] sm:$0x3] %v382
    %v385 = vmul.f32 %v376, %v337
    %v386 = vmul.f32 %v379, %v183
    %v387 = vadd.f32 %v385, %v386
    %v388 = vmul.f32 %v379, %v337
    %v389 = vmul.f32 %v376, %v183
    %v390 = vsub.f32 %v388, %v389
    %v391 = vmul.f32 %v387, %v27
    %v392 = vmul.f32 %v391, 0.7730351
    %v393 = vsub.f32 %v392, 0.29291806
    %s394 = scalar_lea.vmem [#allocation5], 10
    %395 = vst [vmem:[%s394] sm:$0x3] %v393
    %v396 = vmul.f32 %v387, %v337
    %v397 = vmul.f32 %v390, %v183
    %v398 = vadd.f32 %v396, %v397
    %v399 = vmul.f32 %v390, %v337
    %v400 = vmul.f32 %v387, %v183
    %v401 = vsub.f32 %v399, %v400
    %v402 = vmul.f32 %v398, %v27
    %v403 = vmul.f32 %v402, 0.71395946
    %v404 = vsub.f32 %v403, 0.2879642
    %s405 = scalar_lea.vmem [#allocation5], 12
    %406 = vst [vmem:[%s405] sm:$0x3] %v404
    %v407 = vmul.f32 %v398, %v337
    %v408 = vmul.f32 %v401, %v183
    %v409 = vadd.f32 %v407, %v408
    %v410 = vmul.f32 %v409, %v27
    %v411 = vmul.f32 %v410, 0.66141236
    %v412 = vsub.f32 %v411, 0.25265783
    %s413 = scalar_lea.vmem [#allocation5], 14
    %414 = vst [vmem:[%s413] sm:$0x3] %v412
    // Predicated region
    $region10: #{tpu_custom_call.1} parent=1 // pred_check
      _
    $region11: #{tpu_custom_call.1} parent=1 // pred_check_branch
      %416 = sbr.rel (0) target = $region13
    $region12: #{tpu_custom_call.1} parent=1 // pred_region
      %418 = vsyncadd [#allocation4], 0
      %s419 = sshll.u32 [#allocation5], 4
      %s420 = int_to_ptr.vmem [resolvable:$true] %s419
      %s421 = sshll.u32 %s1, 4
      %s422 = int_to_ptr.hbm [resolvable:$true] %s421
      %427 = dma.vmem_to_hbm [thread:$0]  %s420, 256, %s422, [#allocation4], 32, 32, 2
    $region13: #{tpu_custom_call.1} parent=1 // pred_fallthru
      _
    // Predicated region
    $region14: #{tpu_custom_call.1} parent=1 // pred_check
      _
    $region15: #{tpu_custom_call.1} parent=1 // pred_check_branch
      %429 = sbr.rel (0) target = $region17
    $region16: #{tpu_custom_call.1} parent=1 // pred_region
      %431 = dma.done [#allocation4], 256
    $region17: #{tpu_custom_call.1} parent=1 // pred_fallthru
      _
    %432 = vsyncpa [#allocation3], 1
    %433 = vsyncpa [#allocation4], 1

</llo_original>
